<compile_context>
chip_gen: v7x
topology: tpu7x:2x2x1
jax: 0.10.0
libtpu: 0.0.40
codegen_flags: <defaults>
</compile_context>

<pallas_src>
import functools

import numpy as np
import jax
import jax.numpy as jnp
from jax.experimental import pallas as pl
from jax.experimental.pallas import tpu as pltpu


# ----------------------------------------------------------------------------
# Kernel: one (batch b, HW-tile j) block
#   diff = (W_S - W_T)^T @ x_block + (temb_S - temb_T)[T-1]
#   loss_partial[b, j] = sum(diff^2)
# ----------------------------------------------------------------------------
def _distill_loss_kernel(x_ref, wdt_ref, bd_ref, loss_ref):
    x = x_ref[0]                         # (C, THW) f32, HW on the lane axis
    c = x.shape[0]                       # static

    if c < 128:
        # Tiny channel count: skip the MXU, do the channel mix as C unrolled
        # broadcast-FMAs on the VPU (dense vregs, a handful of bundles).
        diff = bd_ref[...] + wdt_ref[:, 0:1] * x[0:1, :]          # (C, THW)
        for k in range(1, c):
            diff = diff + wdt_ref[:, k:k + 1] * x[k:k + 1, :]
    else:
        # Real UNet-sized channel counts: one MXU matmul.
        # (For large C, cast x / wdt to bf16 in the wrapper for full MXU rate.)
        diff = jnp.dot(wdt_ref[...], x,
                       preferred_element_type=jnp.float32) + bd_ref[...]

    # Per-block partial sum of squared error; each grid step owns a distinct
    # output block, so there is no accumulator and the grid is fully parallel.
    loss_ref[...] = jnp.reshape(jnp.sum(diff * diff), (1, 1, 1, 1))


# ----------------------------------------------------------------------------
# Wrapper
# ----------------------------------------------------------------------------
def _pick_hw_tile(hw, max_tile=4096):
    """Largest lane-friendly HW tile (multiple of 128 dividing hw), or the full hw."""
    if hw <= max_tile:
        return hw
    for t in range(max_tile, 127, -128):
        if hw % t == 0:
            return t
    return hw


def distillation_forward(x_nchw, params, T):
    """Pallas equivalent of GaussianDiffusion_distillation_Trainer.forward:
    returns the scalar MSE distillation loss between teacher and student at t = T-1."""
    B, C, H, W = x_nchw.shape
    HW = H * W
    thw = _pick_hw_tile(HW)
    n_hw = HW // thw

    # NCHW -> (B, C, HW): a pure reshape; channels sit on sublanes, HW on lanes.
    x = x_nchw.reshape(B, C, HW).astype(jnp.float32)

    # t = T - 1 for every batch element (per the spec). Fuse teacher/student:
    # only their difference is needed, so precompute the fused weight/bias delta.
    # TODO(synk): real T_model / S_model are external UNets; linear surrogates here.
    wdt = (params["W_S"] - params["W_T"]).T.astype(jnp.float32)        # (C, C)
    bd = (params["temb_S"][T - 1] - params["temb_T"][T - 1])           # (C,)
    bd = bd.reshape(C, 1).astype(jnp.float32)

    loss_partials = pl.pallas_call(
        _distill_loss_kernel,
        out_shape=jax.ShapeDtypeStruct((B, n_hw, 1, 1), jnp.float32),
        grid=(B, n_hw),
        in_specs=[
            pl.BlockSpec((1, C, thw), lambda b, j: (b, 0, j)),         # x block
            pl.BlockSpec((C, C), lambda b, j: (0, 0)),                 # (W_S - W_T)^T
            pl.BlockSpec((C, 1), lambda b, j: (0, 0)),                 # time-bias delta
        ],
        out_specs=pl.BlockSpec((1, 1, 1, 1), lambda b, j: (b, j, 0, 0)),
        compiler_params=pltpu.CompilerParams(
            dimension_semantics=("parallel", "parallel")),
    )(x, wdt, bd)

    # F.mse_loss(..., reduction='mean') over all B*C*H*W elements.
    return jnp.sum(loss_partials) / jnp.float32(B * C * HW)


# ----------------------------------------------------------------------------
# Deterministic buffers / parameters (mirrors the torch __init__)
# ----------------------------------------------------------------------------
def make_buffers(beta_1, beta_T, T):
    """Registered buffers from __init__ (not used by forward, kept for fidelity)."""
    betas = np.linspace(beta_1, beta_T, T, dtype=np.float64)
    alphas = 1.0 - betas
    alphas_bar = np.cumprod(alphas)
    return {
        "betas": jnp.asarray(betas, jnp.float32),
        "sqrt_alphas_bar": jnp.asarray(np.sqrt(alphas_bar), jnp.float32),
        "sqrt_one_minus_alphas_bar": jnp.asarray(np.sqrt(1.0 - alphas_bar), jnp.float32),
    }


def make_models(C, T):
    k1, k2, k3, k4 = jax.random.split(jax.random.PRNGKey(42), 4)
    scale = 1.0 / np.sqrt(C)
    return {
        "W_T": (scale * jax.random.normal(k1, (C, C))).astype(jnp.float32),
        "temb_T": (0.1 * jax.random.normal(k2, (T, C))).astype(jnp.float32),
        "W_S": (scale * jax.random.normal(k3, (C, C))).astype(jnp.float32),
        "temb_S": (0.1 * jax.random.normal(k4, (T, C))).astype(jnp.float32),
    }


if __name__ == "__main__":
    B, C, H, W = 2, 4, 16, 16
    T = 100
    beta_1, beta_T = 1e-4, 0.02

    bufs = make_buffers(beta_1, beta_T, T)   # registered but unused by forward
    params = make_models(C, T)

    key = jax.random.PRNGKey(0)
    x_t = jax.random.normal(key, (B, C, H, W), jnp.float32)

    fwd = jax.jit(functools.partial(distillation_forward, T=T))
    loss = fwd(x_t, params)
    jax.block_until_ready(loss)

    # Pure-JAX reference (teacher / student computed separately, like the torch module).
    x_hwc = jnp.transpose(x_t, (0, 2, 3, 1)).reshape(B, H * W, C)
    teacher = x_hwc @ params["W_T"] + params["temb_T"][T - 1]
    student = x_hwc @ params["W_S"] + params["temb_S"][T - 1]
    ref_loss = jnp.mean((student - teacher) ** 2)

    assert loss.shape == ()
    assert bool(jnp.isfinite(loss))
    assert bool(jnp.allclose(loss, ref_loss, rtol=1e-4, atol=1e-6)), (loss, ref_loss)
    print("KERNEL_OK")
</pallas_src>

<mosaic_0001>
module attributes {stable_mosaic.version = 11 : i64} {
  func.func @_distill_loss_kernel(%arg0: i32, %arg1: i32, %arg2: memref<1x4x256xf32, #tpu.memory_space<vmem>>, %arg3: memref<4x4xf32, #tpu.memory_space<vmem>>, %arg4: memref<4x1xf32, #tpu.memory_space<vmem>>, %arg5: memref<1x1x1x1xf32, #tpu.memory_space<vmem>>) attributes {dimension_semantics = [#tpu.dimension_semantics<parallel>, #tpu.dimension_semantics<parallel>], iteration_bounds = array<i64: 2, 1>, scalar_prefetch = 0 : i64, scratch_operands = 0 : i64, tpu.core_type = #tpu.core_type<tc>, window_params = [{transform_indices = @transform_0, window_bounds = array<i64: 1, 4, 256>}, {pipeline_mode = #tpu.pipeline_mode<synchronous>, transform_indices = @transform_1, window_bounds = array<i64: 4, 4>}, {pipeline_mode = #tpu.pipeline_mode<synchronous>, transform_indices = @transform_2, window_bounds = array<i64: 4, 1>}, {transform_indices = @transform_3, window_bounds = array<i64: 1, 1, 1, 1>}]} {
    %c0 = arith.constant 0 : index
    %c0_0 = arith.constant 0 : index
    %c0_1 = arith.constant 0 : index
    %0 = vector.load %arg2[%c0, %c0_0, %c0_1] : memref<1x4x256xf32, #tpu.memory_space<vmem>>, vector<1x4x256xf32>
    %1 = vector.shape_cast %0 : vector<1x4x256xf32> to vector<4x256xf32>
    %c0_2 = arith.constant 0 : index
    %c0_3 = arith.constant 0 : index
    %2 = vector.load %arg4[%c0_2, %c0_3] : memref<4x1xf32, #tpu.memory_space<vmem>>, vector<4x1xf32>
    %c0_4 = arith.constant 0 : index
    %c0_5 = arith.constant 0 : index
    %3 = vector.load %arg3[%c0_4, %c0_5] : memref<4x4xf32, #tpu.memory_space<vmem>>, vector<4x1xf32>
    %4 = vector.extract_strided_slice %1 {offsets = [0, 0], sizes = [1, 256], strides = [1, 1]} : vector<4x256xf32> to vector<1x256xf32>
    %5 = vector.broadcast %3 : vector<4x1xf32> to vector<4x256xf32>
    %6 = vector.broadcast %4 : vector<1x256xf32> to vector<4x256xf32>
    %7 = arith.mulf %5, %6 : vector<4x256xf32>
    %8 = vector.broadcast %2 : vector<4x1xf32> to vector<4x256xf32>
    %9 = arith.addf %8, %7 : vector<4x256xf32>
    %c0_6 = arith.constant 0 : index
    %c1 = arith.constant 1 : index
    %10 = vector.load %arg3[%c0_6, %c1] : memref<4x4xf32, #tpu.memory_space<vmem>>, vector<4x1xf32>
    %11 = vector.extract_strided_slice %1 {offsets = [1, 0], sizes = [1, 256], strides = [1, 1]} : vector<4x256xf32> to vector<1x256xf32>
    %12 = vector.broadcast %10 : vector<4x1xf32> to vector<4x256xf32>
    %13 = vector.broadcast %11 : vector<1x256xf32> to vector<4x256xf32>
    %14 = arith.mulf %12, %13 : vector<4x256xf32>
    %15 = arith.addf %9, %14 : vector<4x256xf32>
    %c0_7 = arith.constant 0 : index
    %c2 = arith.constant 2 : index
    %16 = vector.load %arg3[%c0_7, %c2] : memref<4x4xf32, #tpu.memory_space<vmem>>, vector<4x1xf32>
    %17 = vector.extract_strided_slice %1 {offsets = [2, 0], sizes = [1, 256], strides = [1, 1]} : vector<4x256xf32> to vector<1x256xf32>
    %18 = vector.broadcast %16 : vector<4x1xf32> to vector<4x256xf32>
    %19 = vector.broadcast %17 : vector<1x256xf32> to vector<4x256xf32>
    %20 = arith.mulf %18, %19 : vector<4x256xf32>
    %21 = arith.addf %15, %20 : vector<4x256xf32>
    %c0_8 = arith.constant 0 : index
    %c3 = arith.constant 3 : index
    %22 = vector.load %arg3[%c0_8, %c3] : memref<4x4xf32, #tpu.memory_space<vmem>>, vector<4x1xf32>
    %23 = vector.extract_strided_slice %1 {offsets = [3, 0], sizes = [1, 256], strides = [1, 1]} : vector<4x256xf32> to vector<1x256xf32>
    %24 = vector.broadcast %22 : vector<4x1xf32> to vector<4x256xf32>
    %25 = vector.broadcast %23 : vector<1x256xf32> to vector<4x256xf32>
    %26 = arith.mulf %24, %25 : vector<4x256xf32>
    %27 = arith.addf %21, %26 : vector<4x256xf32>
    %28 = arith.mulf %27, %27 : vector<4x256xf32>
    %29 = vector.shape_cast %28 : vector<4x256xf32> to vector<1x4x256xf32>
    %cst = arith.constant dense<0.000000e+00> : vector<1xf32>
    %30 = vector.multi_reduction <add>, %29, %cst [1, 2] : vector<1x4x256xf32> to vector<1xf32>
    %31 = vector.shape_cast %30 : vector<1xf32> to vector<1x1x1xf32>
    %32 = vector.extract %31[0, 0, 0] : f32 from vector<1x1x1xf32>
    %33 = vector.broadcast %32 : f32 to vector<1x1x1x1xf32>
    %c0_9 = arith.constant 0 : index
    %c0_10 = arith.constant 0 : index
    %c0_11 = arith.constant 0 : index
    %c0_12 = arith.constant 0 : index
    %34 = vector.load %arg5[%c0_9, %c0_10, %c0_11, %c0_12] : memref<1x1x1x1xf32, #tpu.memory_space<vmem>>, vector<1x1x1x1xf32>
    tpu.vector_store %arg5[%c0_9, %c0_10, %c0_11, %c0_12], %33 {strides = array<i32>} : memref<1x1x1x1xf32, #tpu.memory_space<vmem>>, vector<1x1x1x1xf32>,
    return
  }
  func.func @transform_0(%arg0: i32, %arg1: i32) -> (i32, i32, i32) {
    %c0_i32 = arith.constant 0 : i32
    %c0_i32_0 = arith.constant 0 : i32
    return %arg0, %c0_i32, %arg1 : i32, i32, i32
  }
  func.func @transform_1(%arg0: i32, %arg1: i32) -> (i32, i32) {
    %c0_i32 = arith.constant 0 : i32
    %c0_i32_0 = arith.constant 0 : i32
    %c0_i32_1 = arith.constant 0 : i32
    return %c0_i32, %c0_i32_0 : i32, i32
  }
  func.func @transform_2(%arg0: i32, %arg1: i32) -> (i32, i32) {
    %c0_i32 = arith.constant 0 : i32
    %c0_i32_0 = arith.constant 0 : i32
    %c0_i32_1 = arith.constant 0 : i32
    return %c0_i32, %c0_i32_0 : i32, i32
  }
  func.func @transform_3(%arg0: i32, %arg1: i32) -> (i32, i32, i32, i32) {
    %c0_i32 = arith.constant 0 : i32
    %c0_i32_0 = arith.constant 0 : i32
    %c0_i32_1 = arith.constant 0 : i32
    return %arg0, %arg1, %c0_i32, %c0_i32_0 : i32, i32, i32, i32
  }
}

</mosaic_0001>

<llo_original>
// kernel: distillation_forward.1
$region0: #{distillation_forward.1}
  #allocation0 [shape = 'u32[]', space=smem, size = 0x4, offset = 0x4, fixed_abs, tag = 'smem constant byte address 0x4 - core index']
  #allocation1 [shape = 'u32[144,128]{1,0:T(1,128)}', space=vmem, size = 0x12000, scoped, tag = 'internal scratch']
  %s0 = inlined_call_operand.vmem [shape: f32[2,4,256], index: 0, kind: input, shape index: {}]
  %s1 = inlined_call_operand.vmem [shape: f32[4,4], index: 1, kind: input, shape index: {}]
  %s2 = inlined_call_operand.vmem [shape: f32[4,1], index: 2, kind: input, shape index: {}]
  %s3 = inlined_call_operand.vmem [shape: f32[2,1,1,1], index: 3, kind: output, shape index: {}]
  %s4 = sld [smem:[#allocation0]]
  $region45: #{distillation_forward.1} parent=0
    _
  %s6 = ssub.s32 1, %s4
  %s7 = scalar_select 0, %s6, %s4
  loop: start=0, step=1, limit=4
  $region2: #{distillation_forward.1} parent=0 // loop_pre_header
    _
  $region3: #{distillation_forward.1} parent=0 // loop_header
    %s9 = sphi 0, %s13
    %p10 = scmp.ge.s32.totalorder %s9, 4
    %s16 = sphi 0, %s28
    %s17 = sphi 0, %s24
    %s18 = sphi 0, %s16
    %s19 = sphi 0, %s17
    %s20 = sphi 0, %s18
    %s21 = sphi 0, %s19
    %s33 = sphi 0, %s35
    %s36 = sphi 0, %s33
    %s37 = sphi 0, %s36
    %s53 = sphi 0, %s37
    %s57 = sphi 0, %s57
    %s59 = sphi 0, %s57
    %s60 = sphi 0, %s59
    %s74 = sphi 0, %s60
    %s78 = sphi 0, %s78
    %s80 = sphi 0, %s78
    %s81 = sphi 0, %s80
    %s95 = sphi 0, %s81
    %s103 = sphi 0, %s105
    %s106 = sphi 0, %s103
    %s107 = sphi 0, %s106
    %s123 = sphi 0, %s107
  $region4: #{distillation_forward.1} parent=0 // loop_header_branch
    %12 = sbr.rel (%p10) target = $region8
  $region5: #{distillation_forward.1} parent=0 // loop_body
    %s14 = ssub.s32 %s9, 1
    %s15 = ssub.s32 %s9, 2
    %s22 = sadd.s32 1, %s17
    %p23 = scmp.ge.s32.totalorder %s22, 1
    %s24 = scalar_select %p23, 0, %s22
    %s25 = sadd.s32 1, %s16
    %s26 = scalar_select %p23, %s25, %s16
    %p27 = scmp.ge.s32.totalorder %s26, 2
    %s28 = scalar_select %p27, 0, %s26
    %s29 = ssub.s32 %s16, %s28
    %s30 = ssub.s32 %s17, %s24
    %s31 = sor.u32 %s29, %s30
    %p32 = scmp.eq.s32.totalorder %s31, 0
    %s34 = sadd.s32 %s33, 1
    %s35 = scalar_select %p32, %s33, %s34
    %p38 = pneg %p32
    %p39 = scmp.eq.s32.totalorder %s9, 1
    %p40 = por %p38, %p39
    %p41 = scmp.ne.s32.totalorder %s33, %s36
    %p42 = scmp.eq.s32.totalorder %s9, 0
    %p43 = por %p41, %p42
    %p44 = scmp.ne.s32.totalorder %s33, %s36
    %p45 = scmp.eq.s32.totalorder %s14, 1
    %p46 = por %p44, %p45
    %p47 = scmp.ne.s32.totalorder %s36, %s37
    %p48 = scmp.eq.s32.totalorder %s14, 0
    %p49 = por %p47, %p48
    %p50 = scmp.ne.s32.totalorder %s36, %s37
    %p51 = scmp.eq.s32.totalorder %s15, 1
    %p52 = por %p50, %p51
    %p54 = scmp.ne.s32.totalorder %s37, %s53
    %p55 = scmp.eq.s32.totalorder %s15, 0
    %p56 = por %p54, %p55
    %s58 = sadd.s32 %s57, 1
    %p61 = scmp.eq.s32.totalorder %s9, 1
    %p62 = scmp.ne.s32.totalorder %s57, %s59
    %p63 = scmp.eq.s32.totalorder %s9, 0
    %p64 = por %p62, %p63
    %p65 = scmp.ne.s32.totalorder %s57, %s59
    %p66 = scmp.eq.s32.totalorder %s14, 1
    %p67 = por %p65, %p66
    %p68 = scmp.ne.s32.totalorder %s59, %s60
    %p69 = scmp.eq.s32.totalorder %s14, 0
    %p70 = por %p68, %p69
    %p71 = scmp.ne.s32.totalorder %s59, %s60
    %p72 = scmp.eq.s32.totalorder %s15, 1
    %p73 = por %p71, %p72
    %p75 = scmp.ne.s32.totalorder %s60, %s74
    %p76 = scmp.eq.s32.totalorder %s15, 0
    %p77 = por %p75, %p76
    %s79 = sadd.s32 %s78, 1
    %p82 = scmp.eq.s32.totalorder %s9, 1
    %p83 = scmp.ne.s32.totalorder %s78, %s80
    %p84 = scmp.eq.s32.totalorder %s9, 0
    %p85 = por %p83, %p84
    %p86 = scmp.ne.s32.totalorder %s78, %s80
    %p87 = scmp.eq.s32.totalorder %s14, 1
    %p88 = por %p86, %p87
    %p89 = scmp.ne.s32.totalorder %s80, %s81
    %p90 = scmp.eq.s32.totalorder %s14, 0
    %p91 = por %p89, %p90
    %p92 = scmp.ne.s32.totalorder %s80, %s81
    %p93 = scmp.eq.s32.totalorder %s15, 1
    %p94 = por %p92, %p93
    %p96 = scmp.ne.s32.totalorder %s81, %s95
    %p97 = scmp.eq.s32.totalorder %s15, 0
    %p98 = por %p96, %p97
    %s99 = ssub.s32 %s16, %s28
    %s100 = ssub.s32 %s17, %s24
    %s101 = sor.u32 %s99, %s100
    %p102 = scmp.eq.s32.totalorder %s101, 0
    %s104 = sadd.s32 %s103, 1
    %s105 = scalar_select %p102, %s103, %s104
    %p108 = pneg %p102
    %p109 = scmp.eq.s32.totalorder %s9, 1
    %p110 = por %p108, %p109
    %p111 = scmp.ne.s32.totalorder %s103, %s106
    %p112 = scmp.eq.s32.totalorder %s9, 0
    %p113 = por %p111, %p112
    %p114 = scmp.ne.s32.totalorder %s103, %s106
    %p115 = scmp.eq.s32.totalorder %s14, 1
    %p116 = por %p114, %p115
    %p117 = scmp.ne.s32.totalorder %s106, %s107
    %p118 = scmp.eq.s32.totalorder %s14, 0
    %p119 = por %p117, %p118
    %p120 = scmp.ne.s32.totalorder %s106, %s107
    %p121 = scmp.eq.s32.totalorder %s15, 1
    %p122 = por %p120, %p121
    %p124 = scmp.ne.s32.totalorder %s107, %s123
    %p125 = scmp.eq.s32.totalorder %s15, 0
    %p126 = por %p124, %p125
    %p127 = scmp.le.s32.totalorder 1, %s9
    %p128 = scmp.lt.s32.totalorder %s9, 3
    %p129 = pnand %p127, %p128
    %p130 = pneg %p129
    // Predicated region
    $region9: #{distillation_forward.1} parent=5 // pred_check
      _
    $region10: #{distillation_forward.1} parent=5 // pred_check_branch
      %132 = sbr.rel (%p129) target = $region12
    $region11: #{distillation_forward.1} parent=5 // pred_region
      %s133 = ssub.s32 %s9, 1
      // Predicated region
      $region13: #{distillation_forward.1} parent=11 // pred_check
        %p134 = pneg %p70
      $region14: #{distillation_forward.1} parent=11 // pred_check_branch
        %136 = sbr.rel (%p134) target = $region16
      $region15: #{distillation_forward.1} parent=11 // pred_region
        _
      $region16: #{distillation_forward.1} parent=11 // pred_fallthru
        _
      // Predicated region
      $region17: #{distillation_forward.1} parent=11 // pred_check
        %p137 = pneg %p91
      $region18: #{distillation_forward.1} parent=11 // pred_check_branch
        %139 = sbr.rel (%p137) target = $region20
      $region19: #{distillation_forward.1} parent=11 // pred_region
        _
      $region20: #{distillation_forward.1} parent=11 // pred_fallthru
        _
    $region12: #{distillation_forward.1} parent=5 // pred_fallthru
      _
    %p140 = scmp.lt.s32.totalorder %s9, 2
    // Predicated region
    $region21: #{distillation_forward.1} parent=5 // pred_check
      %p141 = pneg %p140
    $region22: #{distillation_forward.1} parent=5 // pred_check_branch
      %143 = sbr.rel (%p141) target = $region24
    $region23: #{distillation_forward.1} parent=5 // pred_region
      // Predicated region
      $region25: #{distillation_forward.1} parent=23 // pred_check
        %p144 = pneg %p43
      $region26: #{distillation_forward.1} parent=23 // pred_check_branch
        %146 = sbr.rel (%p144) target = $region28
      $region27: #{distillation_forward.1} parent=23 // pred_region
        %s147 = smul.u32 2, %s17
        %p148 = scmp.lt.s32.totalorder %s16, 1
        %s149 = scalar_select %p148, %s16, 1
        %p150 = scmp.lt.s32.totalorder %s147, 1
        %s151 = scalar_select %p150, %s147, 1
        %s152 = smul.addr %s149, 2
        %s153 = sadd.s32 %s151, %s152
        %s154 = smul.addr %s153, 4
        %s155 = scalar_lea.vmem %s0, %s154
        %s156 = smul.u32 2, %s17
      $region28: #{distillation_forward.1} parent=23 // pred_fallthru
        _
    $region24: #{distillation_forward.1} parent=5 // pred_fallthru
      _
    %p157 = scmp.le.s32.totalorder 1, %s9
    %p158 = scmp.lt.s32.totalorder %s9, 3
    %p159 = pnand %p157, %p158
    %p160 = pneg %p159
    // Predicated region
    $region29: #{distillation_forward.1} parent=5 // pred_check
      _
    $region30: #{distillation_forward.1} parent=5 // pred_check_branch
      %162 = sbr.rel (%p159) target = $region32
    $region31: #{distillation_forward.1} parent=5 // pred_region
      %s163 = ssub.s32 %s9, 1
      %s164 = smul.u32 2, %s19
      %p165 = scmp.lt.s32.totalorder %s18, 1
      %s166 = scalar_select %p165, %s18, 1
      %p167 = scmp.lt.s32.totalorder %s164, 1
      %s168 = scalar_select %p167, %s164, 1
      %s169 = smul.addr %s166, 2
      %s170 = sadd.s32 %s168, %s169
      %s171 = smul.addr %s170, 4
      %s172 = scalar_lea.vmem %s0, %s171
      %p173 = pneg %p49
      %p174 = pneg %p46
      %p175 = pneg %p70
      %p176 = pneg %p67
      %p177 = pneg %p91
      %p178 = pneg %p88
      %p179 = pneg %p119
      %p180 = pneg %p116
      %p181 = scmp.lt.s32.totalorder %s18, 1
      %s182 = scalar_select %p181, %s18, 1
      %p183 = scmp.lt.s32.totalorder %s19, 0
      %s184 = scalar_select %p183, %s19, 0
      %s185 = sadd.s32 %s184, %s182
      %s186 = scalar_lea.vmem %s3, %s185
      %s187 = smul.u32 2, %s19
      %p188 = scmp.lt.s32.totalorder %s18, 1
      %s189 = scalar_select %p188, %s18, 1
      %p190 = scmp.lt.s32.totalorder %s187, 1
      %s191 = scalar_select %p190, %s187, 1
      %s192 = smul.addr %s189, 2
      %s193 = sadd.s32 %s191, %s192
      %s194 = smul.addr %s193, 4
      %s195 = scalar_lea.vmem %s0, %s194
      %s196 = smul.u32 2, %s19
      %p197 = scmp.lt.s32.totalorder %s18, 1
      %s198 = scalar_select %p197, %s18, 1
      %p199 = scmp.lt.s32.totalorder %s19, 0
      %s200 = scalar_select %p199, %s19, 0
      %s201 = sadd.s32 %s200, %s198
      %s202 = scalar_lea.vmem %s3, %s201
      %v203 = vld [vmem:[%s195] sm:$0xff]
      %v204 = vld [vmem:[%s2] sm:$0xf]
      %v205 = vld [vmem:[%s1] sm:$0xf]
      %207 = vset.pattern.permute.xlu0 0
      %208 = vperm.xlu0 %207, %v205
      %v209 = vpop.permute.xlu0 %208
      %v212 = vlaneseq
      %v213 = vshrl.u32 %v212, 7
      %v214 = vsub.s32 0, %v213
      %v215 = vrot.slane %v203, %v214
      %v216 = vlaneseq
      %v217 = vshrl.u32 %v216, 7
      %v218 = vsub.s32 4, %v217
      %v219 = vrot.slane %v203, %v218
      %v222 = vlaneseq
      %v223 = vshrl.u32 %v222, 7
      %v224 = vsub.s32 0, %v223
      %v225 = vrot.slane %v215, %v224
      %v226 = vlaneseq
      %v227 = vshrl.u32 %v226, 7
      %v228 = vsub.s32 0, %v227
      %v229 = vrot.slane %v219, %v228
      %v230 = vmul.f32 %v209, %v225
      %v231 = vmul.f32 %v209, %v229
      %233 = vset.pattern.permute.xlu0 0
      %234 = vperm.xlu0 %233, %v204
      %v235 = vpop.permute.xlu0 %234
      %v237 = vadd.f32 %v235, %v230
      %v238 = vadd.f32 %v235, %v231
      %239 = vset.pattern.permute.xlu0 1
      %240 = vperm.xlu0 %239, %v205
      %v241 = vpop.permute.xlu0 %240
      %v243 = vlaneseq
      %v244 = vshrl.u32 %v243, 7
      %v245 = vsub.s32 1, %v244
      %v246 = vrot.slane %v203, %v245
      %v247 = vlaneseq
      %v248 = vshrl.u32 %v247, 7
      %v249 = vsub.s32 5, %v248
      %v250 = vrot.slane %v203, %v249
      %v253 = vlaneseq
      %v254 = vshrl.u32 %v253, 7
      %v255 = vsub.s32 1, %v254
      %v256 = vrot.slane %v246, %v255
      %v257 = vlaneseq
      %v258 = vshrl.u32 %v257, 7
      %v259 = vsub.s32 1, %v258
      %v260 = vrot.slane %v250, %v259
      %v261 = vmul.f32 %v241, %v256
      %v262 = vmul.f32 %v241, %v260
      %v263 = vadd.f32 %v237, %v261
      %v264 = vadd.f32 %v238, %v262
      %265 = vset.pattern.permute.xlu0 2
      %266 = vperm.xlu0 %265, %v205
      %v267 = vpop.permute.xlu0 %266
      %v269 = vlaneseq
      %v270 = vshrl.u32 %v269, 7
      %v271 = vsub.s32 2, %v270
      %v272 = vrot.slane %v203, %v271
      %v273 = vlaneseq
      %v274 = vshrl.u32 %v273, 7
      %v275 = vsub.s32 6, %v274
      %v276 = vrot.slane %v203, %v275
      %v279 = vlaneseq
      %v280 = vshrl.u32 %v279, 7
      %v281 = vsub.s32 2, %v280
      %v282 = vrot.slane %v272, %v281
      %v283 = vlaneseq
      %v284 = vshrl.u32 %v283, 7
      %v285 = vsub.s32 2, %v284
      %v286 = vrot.slane %v276, %v285
      %v287 = vmul.f32 %v267, %v282
      %v288 = vmul.f32 %v267, %v286
      %v289 = vadd.f32 %v263, %v287
      %v290 = vadd.f32 %v264, %v288
      %291 = vset.pattern.permute.xlu0 3
      %292 = vperm.xlu0 %291, %v205
      %v293 = vpop.permute.xlu0 %292
      %v295 = vlaneseq
      %v296 = vshrl.u32 %v295, 7
      %v297 = vsub.s32 3, %v296
      %v298 = vrot.slane %v203, %v297
      %v299 = vlaneseq
      %v300 = vshrl.u32 %v299, 7
      %v301 = vsub.s32 7, %v300
      %v302 = vrot.slane %v203, %v301
      %v305 = vlaneseq
      %v306 = vshrl.u32 %v305, 7
      %v307 = vsub.s32 3, %v306
      %v308 = vrot.slane %v298, %v307
      %v309 = vlaneseq
      %v310 = vshrl.u32 %v309, 7
      %v311 = vsub.s32 3, %v310
      %v312 = vrot.slane %v302, %v311
      %v313 = vmul.f32 %v293, %v308
      %v314 = vmul.f32 %v293, %v312
      %v315 = vadd.f32 %v289, %v313
      %v316 = vadd.f32 %v290, %v314
      %v317 = vmul.f32 %v315, %v315
      %v318 = vmul.f32 %v316, %v316
      %vm319 = vcmask 1043456
      %v320 = vsel %vm319, %v317, 0.0
      %v321 = vsel %vm319, %v318, 0.0
      %v322 = vadd.f32 %v320, %v321
      %323 = vadd.xlane.f32.xlu0 %v322
      %v324 = vpop.xlane.xlu0 %323
      %v325 = vrot.slane %v324, 4
      %v326 = vadd.f32 %v324, %v325
      %v327 = vrot.slane %v326, 2
      %v328 = vadd.f32 %v326, %v327
      %v329 = vrot.slane %v328, 1
      %v330 = vadd.f32 %v328, %v329
      %s331 = vtos %v330
      %v332 = vstv %s331
      %vm333 = vcmask 0
      %334 = vst.msk [vmem:[%s202] sm:$0x1] %vm333, %v332
      %p335 = scmp.lt.s32.totalorder %s18, 1
      %s336 = scalar_select %p335, %s18, 1
      %p337 = scmp.lt.s32.totalorder %s19, 0
      %s338 = scalar_select %p337, %s19, 0
      %s339 = sadd.s32 %s338, %s336
      %s340 = scalar_lea.vmem %s3, %s339
      // Predicated region
      $region33: #{distillation_forward.1} parent=31 // pred_check
        %p341 = pneg %p116
      $region34: #{distillation_forward.1} parent=31 // pred_check_branch
        %343 = sbr.rel (%p341) target = $region36
      $region35: #{distillation_forward.1} parent=31 // pred_region
        _
      $region36: #{distillation_forward.1} parent=31 // pred_fallthru
        _
    $region32: #{distillation_forward.1} parent=5 // pred_fallthru
      _
    %p344 = scmp.le.s32.totalorder 2, %s9
    // Predicated region
    $region37: #{distillation_forward.1} parent=5 // pred_check
      %p345 = pneg %p344
    $region38: #{distillation_forward.1} parent=5 // pred_check_branch
      %347 = sbr.rel (%p345) target = $region40
    $region39: #{distillation_forward.1} parent=5 // pred_region
      %s348 = ssub.s32 %s9, 2
      // Predicated region
      $region41: #{distillation_forward.1} parent=39 // pred_check
        %p349 = pneg %p122
      $region42: #{distillation_forward.1} parent=39 // pred_check_branch
        %351 = sbr.rel (%p349) target = $region44
      $region43: #{distillation_forward.1} parent=39 // pred_region
        %p352 = scmp.lt.s32.totalorder %s20, 1
        %s353 = scalar_select %p352, %s20, 1
        %p354 = scmp.lt.s32.totalorder %s21, 0
        %s355 = scalar_select %p354, %s21, 0
        %s356 = sadd.s32 %s355, %s353
        %s357 = scalar_lea.vmem %s3, %s356
      $region44: #{distillation_forward.1} parent=39 // pred_fallthru
        _
    $region40: #{distillation_forward.1} parent=5 // pred_fallthru
      _
  $region6: #{distillation_forward.1} parent=0 // loop_footer
    %s13 = sadd.s32 1, %s9
  $region7: #{distillation_forward.1} parent=0 // loop_footer_branch
    %8 = sbr.rel target = $region3
  $region8: #{distillation_forward.1} parent=0 // loop_exit
    _

</llo_original>
